<compile_context>
chip_gen: v7x
topology: tpu7x:2x2x1
jax: 0.10.0
libtpu: 0.0.40
codegen_flags: <defaults>
</compile_context>

<pallas_src>
import jax
import jax.numpy as jnp
from jax import lax
from jax.experimental import pallas as pl
from jax.experimental.pallas import tpu as pltpu

_ROWS, _LANES = 8, 128  # one full (8, 128) f32 vreg tile


# ----------------------------------------------------------------------------
# Optional: deterministic parameter init mirroring __init__
# (Linear(81,18), Linear(18,10)).  NOT called on the forward path — exactly
# like the PyTorch module, forward never touches these layers.
# ----------------------------------------------------------------------------
def init_params(layer_sizes=(81, 18, 10), seed=0):
    # TODO(synk): layers are defined in __init__ but never used by forward
    # (matches PyTorch); kept only as an optional helper for callers.
    key = jax.random.PRNGKey(seed)
    params = []
    for i in range(len(layer_sizes) - 1):
        fan_in, fan_out = layer_sizes[i], layer_sizes[i + 1]
        key, kw, kb = jax.random.split(key, 3)
        bound = 1.0 / jnp.sqrt(fan_in)
        w = jax.random.uniform(kw, (fan_out, fan_in), jnp.float32, -bound, bound)
        b = jax.random.uniform(kb, (fan_out,), jnp.float32, -bound, bound)
        params.append((w, b))
    return params


# ----------------------------------------------------------------------------
# Pallas kernel: lane-dense (8, 128) tile; out[0, 0] = 1 iff species == 1.
# ----------------------------------------------------------------------------
def _mock_forward_kernel(species_ref, out_ref):
    # Unconditional zero of the full tile: single unmasked full-tile store.
    out_ref[...] = jnp.zeros_like(out_ref)

    # Scalar-gated cold path: only runs (and only does VPU work) when
    # species == 1; the scalar compare runs on the scalar unit.
    @pl.when(species_ref[0] == 1)
    def _():
        r = lax.broadcasted_iota(jnp.int32, out_ref.shape, 0)
        c = lax.broadcasted_iota(jnp.int32, out_ref.shape, 1)
        one_hot = jnp.where(jnp.logical_and(r == 0, c == 0), 1.0, 0.0)
        out_ref[...] = one_hot.astype(out_ref.dtype)


# ----------------------------------------------------------------------------
# Jitted forward: mirrors MockModel.forward(x, species).
# `x` is accepted (matching the PyTorch signature) but, exactly like the
# reference module, the forward pass does not use it.
# ----------------------------------------------------------------------------
@jax.jit
def mock_model_forward(x, species):
    # Reproduce the side-effecting print from the reference forward; runs at
    # execution time (per call) even under jit.
    jax.debug.print("species: {}", species)

    species_arr = jnp.asarray(species, dtype=jnp.int32).reshape((1,))

    tile = pl.pallas_call(
        _mock_forward_kernel,
        out_shape=jax.ShapeDtypeStruct((_ROWS, _LANES), jnp.float32),
        in_specs=[pl.BlockSpec(memory_space=pltpu.MemorySpace.SMEM)],
        out_specs=pl.BlockSpec((_ROWS, _LANES), lambda: (0, 0)),
    )(species_arr)

    # Slice the semantic (1, 5) result out of the lane-dense tile.
    return tile[0:1, 0:5]


if __name__ == "__main__":
    key = jax.random.PRNGKey(0)
    # Small input consistent with layer_sizes[0] = 81 features (unused by forward).
    x = jax.random.normal(key, (2, 81), dtype=jnp.float32)

    out1 = jax.block_until_ready(mock_model_forward(x, jnp.int32(1)))
    out0 = jax.block_until_ready(mock_model_forward(x, jnp.int32(2)))

    expected1 = jnp.array([[1.0, 0.0, 0.0, 0.0, 0.0]], dtype=jnp.float32)
    expected0 = jnp.zeros((1, 5), dtype=jnp.float32)

    assert out1.shape == (1, 5) and out1.dtype == jnp.float32
    assert out0.shape == (1, 5) and out0.dtype == jnp.float32
    assert bool(jnp.all(out1 == expected1))
    assert bool(jnp.all(out0 == expected0))

    print("KERNEL_OK")
</pallas_src>

<mosaic_0001>
module attributes {stable_mosaic.version = 11 : i64} {
  func.func @_mock_forward_kernel(%arg0: memref<1xi32, #tpu.memory_space<smem>>, %arg1: memref<8x128xf32, #tpu.memory_space<vmem>>) attributes {dimension_semantics = [], scalar_prefetch = 0 : i64, scratch_operands = 0 : i64, tpu.core_type = #tpu.core_type<tc>} {
    %cst = arith.constant 0.000000e+00 : f32
    %0 = vector.broadcast %cst : f32 to vector<8x128xf32>
    %c0 = arith.constant 0 : index
    %c0_0 = arith.constant 0 : index
    %1 = vector.load %arg1[%c0, %c0_0] : memref<8x128xf32, #tpu.memory_space<vmem>>, vector<8x128xf32>
    tpu.vector_store %arg1[%c0, %c0_0], %0 {strides = array<i32>} : memref<8x128xf32, #tpu.memory_space<vmem>>, vector<8x128xf32>,
    %c0_1 = arith.constant 0 : index
    %2 = memref.load %arg0[%c0_1] : memref<1xi32, #tpu.memory_space<smem>>
    %c1_i32 = arith.constant 1 : i32
    %3 = arith.cmpi eq, %2, %c1_i32 : i32
    %4 = arith.extui %3 : i1 to i32
    %c0_i32 = arith.constant 0 : i32
    %5 = arith.cmpi ne, %4, %c0_i32 : i32
    scf.if %5 {
      %6 = tpu.iota {dimensions = array<i32: 0>} : vector<8x128xi32>
      %7 = tpu.iota {dimensions = array<i32: 1>} : vector<8x128xi32>
      %c0_i32_2 = arith.constant 0 : i32
      %8 = vector.broadcast %c0_i32_2 : i32 to vector<8x128xi32>
      %9 = arith.cmpi eq, %6, %8 : vector<8x128xi32>
      %c0_i32_3 = arith.constant 0 : i32
      %10 = vector.broadcast %c0_i32_3 : i32 to vector<8x128xi32>
      %11 = arith.cmpi eq, %7, %10 : vector<8x128xi32>
      %12 = arith.andi %9, %11 : vector<8x128xi1>
      %cst_4 = arith.constant 1.000000e+00 : f32
      %cst_5 = arith.constant 0.000000e+00 : f32
      %13 = vector.broadcast %cst_4 : f32 to vector<8x128xf32>
      %14 = vector.broadcast %cst_5 : f32 to vector<8x128xf32>
      %15 = arith.select %12, %13, %14 : vector<8x128xi1>, vector<8x128xf32>
      %c0_6 = arith.constant 0 : index
      %c0_7 = arith.constant 0 : index
      %16 = vector.load %arg1[%c0_6, %c0_7] : memref<8x128xf32, #tpu.memory_space<vmem>>, vector<8x128xf32>
      tpu.vector_store %arg1[%c0_6, %c0_7], %15 {strides = array<i32>} : memref<8x128xf32, #tpu.memory_space<vmem>>, vector<8x128xf32>,
    } else {
    }
    return
  }
}

</mosaic_0001>

<llo_original>
// kernel: mock_model_forward.1
$region0: #{mock_model_forward.1}
  #allocation0 [shape = 'u32[]', space=smem, size = 0x4, offset = 0x4, fixed_abs, tag = 'smem constant byte address 0x4 - core index']
  #allocation1 [shape = 'u32[144,128]{1,0:T(1,128)}', space=vmem, size = 0x12000, scoped, tag = 'internal scratch']
  #allocation2 [shape = 's32[1]{0:T(128)S(6)}', space=smem, size = 0x200, scoped, tag = 'scoped memory for mock_model_forward.1']
  %s0 = inlined_call_operand.<no memory space> [shape: s32[1], index: 0, kind: input, shape index: {}]
  %s1 = inlined_call_operand.vmem [shape: f32[8,128], index: 1, kind: output, shape index: {}]
  %s2 = sld [smem:[#allocation0]]
  $region18: #{mock_model_forward.1} parent=0
    _
  %s4 = ssub.s32 1, %s2
  %s5 = scalar_select 0, %s4, %s2
  %6 = sst [smem:[#allocation2]] %s0
  // Predicated region
  $region2: #{mock_model_forward.1} parent=0 // pred_check
    _
  $region3: #{mock_model_forward.1} parent=0 // pred_check_branch
    %8 = sbr.rel (0) target = $region5
  $region4: #{mock_model_forward.1} parent=0 // pred_region
    _
  $region5: #{mock_model_forward.1} parent=0 // pred_fallthru
    _
  %9 = vst [vmem:[%s1] sm:$0xff] 0.0
  %s10 = sld [smem:[#allocation2]]
  %p11 = scmp.eq.s32.totalorder %s10, 1
  // Predicated region
  $region6: #{mock_model_forward.1} parent=0 // pred_check
    %p12 = pneg %p11
  $region7: #{mock_model_forward.1} parent=0 // pred_check_branch
    %14 = sbr.rel (%p12) target = $region9
  $region8: #{mock_model_forward.1} parent=0 // pred_region
    %v15 = vlaneseq
    %v16 = vshrl.u32 %v15, 7
    %v17 = vlaneseq
    %v18 = vand.u32 %v17, 127
    %vm19 = vcmp.eq.s32.totalorder %v16, 0
    %vm20 = vcmp.eq.s32.totalorder %v18, 0
    %vm21 = vmand %vm19, %vm20
    %v22 = vsel %vm21, 1.0, 0.0
    %23 = vst [vmem:[%s1] sm:$0xff] %v22
  $region9: #{mock_model_forward.1} parent=0 // pred_fallthru
    _
  // Predicated region
  $region10: #{mock_model_forward.1} parent=0 // pred_check
    _
  $region11: #{mock_model_forward.1} parent=0 // pred_check_branch
    %25 = sbr.rel (0) target = $region13
  $region12: #{mock_model_forward.1} parent=0 // pred_region
    _
  $region13: #{mock_model_forward.1} parent=0 // pred_fallthru
    _
  // Predicated region
  $region14: #{mock_model_forward.1} parent=0 // pred_check
    _
  $region15: #{mock_model_forward.1} parent=0 // pred_check_branch
    %27 = sbr.rel (0) target = $region17
  $region16: #{mock_model_forward.1} parent=0 // pred_region
    _
  $region17: #{mock_model_forward.1} parent=0 // pred_fallthru
    _

</llo_original>
